<compile_context>
chip_gen: v6e
topology: v6e:2x2x1
jax: 0.10.0
libtpu: 0.0.40
codegen_flags: <defaults>
</compile_context>

<pallas_src>
import functools

import jax
import jax.numpy as jnp
from jax.experimental import pallas as pl
from jax.experimental.pallas import tpu as pltpu

SE_RATIO = 16


def _vmem_budget_bytes():
    try:
        cap = int(pltpu.get_tpu_info().vmem_capacity_bytes)
    except Exception:
        cap = 64 << 20            # conservative fallback: v7x physical VMEM
    return int(0.75 * cap)        # headroom for Mosaic internals


def _choose_hw_tile(n, hw, c, itemsize, budget_bytes):
    """HW (sublane) tile for the streaming passes."""
    per_row = c * itemsize
    # Capacity: pass 2 holds 2 input + 2 output double-buffered (t_hw, C) blocks.
    t_cap = max(8, (budget_bytes // (4 * per_row)) // 8 * 8)
    # Pipelining: aim for >= ~8 total grid steps so each TensorCore sees several
    # steps and DMA/compute overlap has something to work with.
    want_tiles = max(1, -(-8 // n))
    t_pipe = -(-hw // want_tiles)
    t_pipe = max(8, -(-t_pipe // 8) * 8)
    t = min(t_cap, t_pipe)
    if t >= hw:
        return hw
    return max(8, t)


def _pool_kernel(x_ref, pooled_ref, *, hw, t_hw, needs_mask):
    # x_ref:      (1, t_hw, C) native dtype block of the (N, HW, C) input.
    # pooled_ref: (1, 1, C) f32, resident across the HW-tile axis (accumulator).
    j = pl.program_id(1)

    @pl.when(j == 0)
    def _():
        pooled_ref[...] = jnp.zeros_like(pooled_ref)

    x = x_ref[...].astype(jnp.float32)
    if needs_mask:  # ragged last HW tile: zero the padded sublanes
        row = jax.lax.broadcasted_iota(jnp.int32, x.shape, 1)
        x = jnp.where(row < (hw - j * t_hw), x, 0.0)
    pooled_ref[...] += jnp.sum(x, axis=1, keepdims=True)

    @pl.when(j == pl.num_programs(1) - 1)
    def _():
        pooled_ref[...] *= jnp.float32(1.0 / hw)


def _excite_kernel(pooled_ref, w1_ref, w2_ref, gate_ref):
    # pooled_ref: (N, 1, C) f32; w1: (C, R) f32; w2: (R, C) f32; gate: (N, 1, C) f32.
    p = pooled_ref[...][:, 0, :]                                      # (N, C)
    h = jnp.dot(p, w1_ref[...], preferred_element_type=jnp.float32)   # (N, R)
    h = jnp.maximum(h, 0.0)                                           # ReLU
    a = jnp.dot(h, w2_ref[...], preferred_element_type=jnp.float32)   # (N, C)
    gate_ref[...] = jax.nn.sigmoid(a)[:, None, :]


def _scale_kernel(x_ref, gate_ref, o_ref):
    # x_ref/o_ref: (1, t_hw, C) native dtype; gate_ref: (1, 1, C) f32.
    # Multiply in f32 (gate keeps full precision), store in the native dtype.
    o_ref[...] = (x_ref[...].astype(jnp.float32) * gate_ref[...]).astype(o_ref.dtype)


def se_layer_nhwc_flat(x_flat, w1_oi, w2_oi, *, donate_x=False):
    """x_flat: (N, HW, C) in its native dtype (f32 or bf16).
    w1_oi: (C//SE_RATIO, C), w2_oi: (C, C//SE_RATIO) — PyTorch nn.Linear
    (out_features, in_features) convention, no bias."""
    n, hw, c = x_flat.shape
    r = c // SE_RATIO
    assert r >= 1, "channels must be >= SE_RATIO"
    dtype = x_flat.dtype
    itemsize = jnp.dtype(dtype).itemsize

    w1 = jnp.asarray(w1_oi, jnp.float32).T        # (C, R)
    w2 = jnp.asarray(w2_oi, jnp.float32).T        # (R, C)

    budget = _vmem_budget_bytes()
    t_hw = _choose_hw_tile(n, hw, c, itemsize, budget)
    n_hw = pl.cdiv(hw, t_hw)
    block_bytes = t_hw * c * itemsize
    gate_bytes = c * 4

    need_pool = 2 * block_bytes + 2 * gate_bytes + (2 << 20)
    need_scale = 4 * block_bytes + 2 * gate_bytes + (2 << 20)
    if need_scale > budget:
        # TODO(synk): also tile the channel axis for truly enormous C (a single
        # (8, C) row-block no longer fits VMEM) instead of failing.
        raise ValueError(
            f"SE scale pass needs {need_scale} B VMEM > budget {budget} B")

    vmem_pool = int(min(budget, max(need_pool, 16 << 20)))
    vmem_scale = int(min(budget, max(need_scale, 16 << 20)))

    # ---- pass 1: squeeze (per-sample channel means), f32 accumulation -------
    pooled = pl.pallas_call(
        functools.partial(_pool_kernel, hw=hw, t_hw=t_hw,
                          needs_mask=(hw % t_hw != 0)),
        out_shape=jax.ShapeDtypeStruct((n, 1, c), jnp.float32),
        grid=(n, n_hw),
        in_specs=[pl.BlockSpec((1, t_hw, c), lambda i, j: (i, j, 0))],
        out_specs=pl.BlockSpec((1, 1, c), lambda i, j: (i, 0, 0)),
        compiler_params=pltpu.CompilerParams(
            dimension_semantics=("parallel", "arbitrary"),
            vmem_limit_bytes=vmem_pool,
        ),
        cost_estimate=pl.CostEstimate(
            flops=n * hw * c,
            transcendentals=0,
            bytes_accessed=n * hw * c * itemsize + n * c * 4,
        ),
    )(x_flat)

    # ---- excitation: batched tiny MLP + sigmoid, all operands VMEM-resident --
    gate = pl.pallas_call(
        _excite_kernel,
        out_shape=jax.ShapeDtypeStruct((n, 1, c), jnp.float32),
        in_specs=[
            pl.BlockSpec((n, 1, c), lambda: (0, 0, 0)),
            pl.BlockSpec((c, r), lambda: (0, 0)),
            pl.BlockSpec((r, c), lambda: (0, 0)),
        ],
        out_specs=pl.BlockSpec((n, 1, c), lambda: (0, 0, 0)),
        cost_estimate=pl.CostEstimate(
            flops=4 * n * c * r,
            transcendentals=n * c,
            bytes_accessed=2 * n * c * 4 + 2 * c * r * 4,
        ),
    )(pooled, w1, w2)

    # ---- pass 2: elementwise scale, streamed over (N, HW tiles) -------------
    out = pl.pallas_call(
        _scale_kernel,
        out_shape=jax.ShapeDtypeStruct((n, hw, c), dtype),
        grid=(n, n_hw),
        in_specs=[
            pl.BlockSpec((1, t_hw, c), lambda i, j: (i, j, 0)),
            pl.BlockSpec((1, 1, c), lambda i, j: (i, 0, 0)),
        ],
        out_specs=pl.BlockSpec((1, t_hw, c), lambda i, j: (i, j, 0)),
        compiler_params=pltpu.CompilerParams(
            dimension_semantics=("parallel", "parallel"),
            vmem_limit_bytes=vmem_scale,
        ),
        cost_estimate=pl.CostEstimate(
            flops=n * hw * c,
            transcendentals=0,
            bytes_accessed=2 * n * hw * c * itemsize + n * c * 4,
        ),
        input_output_aliases=({0: 0} if donate_x else {}),
    )(x_flat, gate)
    return out


def se_layer(x_nchw, w1_oi, w2_oi, *, donate_x=False):
    """NCHW entry point matching the PyTorch module's forward."""
    n, c, h, w = x_nchw.shape
    x_flat = jnp.transpose(x_nchw, (0, 2, 3, 1)).reshape(n, h * w, c)
    out = se_layer_nhwc_flat(x_flat, w1_oi, w2_oi, donate_x=donate_x)
    return jnp.transpose(out.reshape(n, h, w, c), (0, 3, 1, 2))


def _reference(x_nchw, w1_oi, w2_oi):
    # Pure-JAX reference mirroring the PyTorch forward (computed in f32).
    xf = x_nchw.astype(jnp.float32)
    pooled = jnp.mean(xf, axis=(2, 3))                                   # (N, C)
    hdn = jnp.maximum(pooled @ jnp.asarray(w1_oi, jnp.float32).T, 0.0)   # (N, R)
    a = jax.nn.sigmoid(hdn @ jnp.asarray(w2_oi, jnp.float32).T)          # (N, C)
    return xf * a[:, :, None, None]


if __name__ == "__main__":
    key = jax.random.PRNGKey(0)
    k_x, k_w1, k_w2 = jax.random.split(key, 3)

    N, C, H, W = 2, 32, 16, 16            # C must be divisible by SE_RATIO
    R = C // SE_RATIO                     # = 2

    x = jax.random.normal(k_x, (N, C, H, W), dtype=jnp.float32)
    # PyTorch nn.Linear weight shapes: (out_features, in_features), no bias.
    w1 = jax.random.normal(k_w1, (R, C), dtype=jnp.float32) * (1.0 / jnp.sqrt(C))
    w2 = jax.random.normal(k_w2, (C, R), dtype=jnp.float32) * (1.0 / jnp.sqrt(R))

    # float32 path: strict check against the pure-JAX reference.
    out = se_layer(x, w1, w2)
    jax.block_until_ready(out)
    ref = _reference(x, w1, w2)
    assert out.shape == x.shape and out.dtype == x.dtype
    assert jnp.allclose(out, ref, atol=1e-4, rtol=1e-4)

    # bf16 path: native-dtype HBM streaming, f32 gate math; loose check.
    x_bf16 = x.astype(jnp.bfloat16)
    out_bf16 = se_layer(x_bf16, w1, w2)
    jax.block_until_ready(out_bf16)
    ref_bf16 = _reference(x_bf16, w1, w2)
    assert out_bf16.dtype == jnp.bfloat16 and out_bf16.shape == x.shape
    assert jnp.allclose(out_bf16.astype(jnp.float32), ref_bf16,
                        atol=5e-2, rtol=5e-2)

    print("KERNEL_OK")
</pallas_src>

<mosaic_0001>
module attributes {stable_mosaic.version = 11 : i64} {
  func.func @_pool_kernel(%arg0: i32, %arg1: i32, %arg2: memref<1x64x32xf32, #tpu.memory_space<vmem>>, %arg3: memref<1x1x32xf32, #tpu.memory_space<vmem>>) attributes {dimension_semantics = [#tpu.dimension_semantics<parallel>, #tpu.dimension_semantics<arbitrary>], iteration_bounds = array<i64: 2, 4>, scalar_prefetch = 0 : i64, scratch_operands = 0 : i64, tpu.core_type = #tpu.core_type<tc>, window_params = [{transform_indices = @transform_0, window_bounds = array<i64: 1, 64, 32>}, {transform_indices = @transform_1, window_bounds = array<i64: 1, 1, 32>}]} {
    %c0_i32 = arith.constant 0 : i32
    %0 = arith.cmpi eq, %arg1, %c0_i32 : i32
    %1 = arith.extui %0 : i1 to i32
    %c0_i32_0 = arith.constant 0 : i32
    %2 = arith.cmpi ne, %1, %c0_i32_0 : i32
    scf.if %2 {
      %cst_10 = arith.constant 0.000000e+00 : f32
      %12 = vector.broadcast %cst_10 : f32 to vector<1x1x32xf32>
      %c0_11 = arith.constant 0 : index
      %c0_12 = arith.constant 0 : index
      %c0_13 = arith.constant 0 : index
      %13 = vector.load %arg3[%c0_11, %c0_12, %c0_13] : memref<1x1x32xf32, #tpu.memory_space<vmem>>, vector<1x1x32xf32>
      tpu.vector_store %arg3[%c0_11, %c0_12, %c0_13], %12 {strides = array<i32>} : memref<1x1x32xf32, #tpu.memory_space<vmem>>, vector<1x1x32xf32>,
    } else {
    }
    %c0 = arith.constant 0 : index
    %c0_1 = arith.constant 0 : index
    %c0_2 = arith.constant 0 : index
    %3 = vector.load %arg2[%c0, %c0_1, %c0_2] : memref<1x64x32xf32, #tpu.memory_space<vmem>>, vector<1x64x32xf32>
    %c0_3 = arith.constant 0 : index
    %c0_4 = arith.constant 0 : index
    %c0_5 = arith.constant 0 : index
    %4 = vector.load %arg3[%c0_3, %c0_4, %c0_5] : memref<1x1x32xf32, #tpu.memory_space<vmem>>, vector<1x1x32xf32>
    %cst = arith.constant dense<0.000000e+00> : vector<1x32xf32>
    %5 = vector.multi_reduction <add>, %3, %cst [1] : vector<1x64x32xf32> to vector<1x32xf32>
    %6 = vector.shape_cast %5 : vector<1x32xf32> to vector<1x1x32xf32>
    %7 = arith.addf %4, %6 : vector<1x1x32xf32>
    %c0_6 = arith.constant 0 : index
    %c0_7 = arith.constant 0 : index
    %c0_8 = arith.constant 0 : index
    %8 = vector.load %arg3[%c0_6, %c0_7, %c0_8] : memref<1x1x32xf32, #tpu.memory_space<vmem>>, vector<1x1x32xf32>
    tpu.vector_store %arg3[%c0_6, %c0_7, %c0_8], %7 {strides = array<i32>} : memref<1x1x32xf32, #tpu.memory_space<vmem>>, vector<1x1x32xf32>,
    %c3_i32 = arith.constant 3 : i32
    %9 = arith.cmpi eq, %arg1, %c3_i32 : i32
    %10 = arith.extui %9 : i1 to i32
    %c0_i32_9 = arith.constant 0 : i32
    %11 = arith.cmpi ne, %10, %c0_i32_9 : i32
    scf.if %11 {
      %c0_10 = arith.constant 0 : index
      %c0_11 = arith.constant 0 : index
      %c0_12 = arith.constant 0 : index
      %12 = vector.load %arg3[%c0_10, %c0_11, %c0_12] : memref<1x1x32xf32, #tpu.memory_space<vmem>>, vector<1x1x32xf32>
      %cst_13 = arith.constant 3.906250e-03 : f32
      %13 = vector.broadcast %cst_13 : f32 to vector<1x1x32xf32>
      %14 = arith.mulf %12, %13 : vector<1x1x32xf32>
      %c0_14 = arith.constant 0 : index
      %c0_15 = arith.constant 0 : index
      %c0_16 = arith.constant 0 : index
      %15 = vector.load %arg3[%c0_14, %c0_15, %c0_16] : memref<1x1x32xf32, #tpu.memory_space<vmem>>, vector<1x1x32xf32>
      tpu.vector_store %arg3[%c0_14, %c0_15, %c0_16], %14 {strides = array<i32>} : memref<1x1x32xf32, #tpu.memory_space<vmem>>, vector<1x1x32xf32>,
    } else {
    }
    return
  }
  func.func @transform_0(%arg0: i32, %arg1: i32) -> (i32, i32, i32) {
    %c0_i32 = arith.constant 0 : i32
    %c0_i32_0 = arith.constant 0 : i32
    return %arg0, %arg1, %c0_i32 : i32, i32, i32
  }
  func.func @transform_1(%arg0: i32, %arg1: i32) -> (i32, i32, i32) {
    %c0_i32 = arith.constant 0 : i32
    %c0_i32_0 = arith.constant 0 : i32
    %c0_i32_1 = arith.constant 0 : i32
    return %arg0, %c0_i32, %c0_i32_0 : i32, i32, i32
  }
}

</mosaic_0001>

<llo_original>
// kernel: tpu_custom_call.1
$region0: #{tpu_custom_call.1}
  #allocation0 [shape = 'u32[]', space=smem, size = 0x4, offset = 0x4, fixed_abs, tag = 'smem constant byte address 0x4 - core index']
  #allocation1 [shape = 'u32[144,128]{1,0:T(1,128)}', space=vmem, size = 0x12000, scoped, tag = 'internal scratch']
  %s0 = inlined_call_operand.vmem [shape: f32[2,256,32], index: 0, kind: input, shape index: {}]
  %s1 = inlined_call_operand.hbm [shape: f32[2,1,32], index: 1, kind: output, shape index: {}]
  %s2 = sld [smem:[#allocation0]]
  $region45: #{tpu_custom_call.1} parent=0
    _
  %s4 = ssub.s32 1, %s2
  %s5 = scalar_select 0, %s4, %s2
  $region1: #{tpu_custom_call.1} parent=0
    #allocation2 [shape = 'u8[1024]{0}', space=vmem, size = 0x400, scoped, tag = 'output window, operand 0']
    #allocation3 [shape = 's32[2]{0}', space=sflag, size = 0x8, scoped, tag = 'scoped memory for tpu_custom_call.1']
    %6 = vsyncpa [#allocation3], 0
    %s7 = scalar_lea.sflag [#allocation3], 1
    %8 = vsyncpa %s7, 0
    loop: start=0, step=1, limit=10
    $region2: #{tpu_custom_call.1} parent=1 // loop_pre_header
      _
    $region3: #{tpu_custom_call.1} parent=1 // loop_header
      %s10 = sphi 0, %s14
      %p11 = scmp.ge.s32.totalorder %s10, 10
      %s17 = sphi 0, %s29
      %s18 = sphi 0, %s25
      %s19 = sphi 0, %s17
      %s20 = sphi 0, %s18
      %s21 = sphi 0, %s19
      %s22 = sphi 0, %s20
      %s34 = sphi 0, %s36
      %s37 = sphi 0, %s34
      %s38 = sphi 0, %s37
      %s54 = sphi 0, %s38
      %s60 = sphi 0, %s62
      %s63 = sphi 0, %s60
      %s64 = sphi 0, %s63
      %s80 = sphi 0, %s64
    $region4: #{tpu_custom_call.1} parent=1 // loop_header_branch
      %13 = sbr.rel (%p11) target = $region8
    $region5: #{tpu_custom_call.1} parent=1 // loop_body
      %s15 = ssub.s32 %s10, 1
      %s16 = ssub.s32 %s10, 2
      %s23 = sadd.s32 1, %s18
      %p24 = scmp.ge.s32.totalorder %s23, 4
      %s25 = scalar_select %p24, 0, %s23
      %s26 = sadd.s32 1, %s17
      %s27 = scalar_select %p24, %s26, %s17
      %p28 = scmp.ge.s32.totalorder %s27, 2
      %s29 = scalar_select %p28, 0, %s27
      %s30 = ssub.s32 %s17, %s29
      %s31 = ssub.s32 %s18, %s25
      %s32 = sor.u32 %s30, %s31
      %p33 = scmp.eq.s32.totalorder %s32, 0
      %s35 = sadd.s32 %s34, 1
      %s36 = scalar_select %p33, %s34, %s35
      %p39 = pneg %p33
      %p40 = scmp.eq.s32.totalorder %s10, 7
      %p41 = por %p39, %p40
      %p42 = scmp.ne.s32.totalorder %s34, %s37
      %p43 = scmp.eq.s32.totalorder %s10, 0
      %p44 = por %p42, %p43
      %p45 = scmp.ne.s32.totalorder %s34, %s37
      %p46 = scmp.eq.s32.totalorder %s15, 7
      %p47 = por %p45, %p46
      %p48 = scmp.ne.s32.totalorder %s37, %s38
      %p49 = scmp.eq.s32.totalorder %s15, 0
      %p50 = por %p48, %p49
      %p51 = scmp.ne.s32.totalorder %s37, %s38
      %p52 = scmp.eq.s32.totalorder %s16, 7
      %p53 = por %p51, %p52
      %p55 = scmp.ne.s32.totalorder %s38, %s54
      %p56 = scmp.eq.s32.totalorder %s16, 0
      %p57 = por %p55, %p56
      %s58 = ssub.s32 %s17, %s29
      %p59 = scmp.eq.s32.totalorder %s58, 0
      %s61 = sadd.s32 %s60, 1
      %s62 = scalar_select %p59, %s60, %s61
      %p65 = pneg %p59
      %p66 = scmp.eq.s32.totalorder %s10, 7
      %p67 = por %p65, %p66
      %p68 = scmp.ne.s32.totalorder %s60, %s63
      %p69 = scmp.eq.s32.totalorder %s10, 0
      %p70 = por %p68, %p69
      %p71 = scmp.ne.s32.totalorder %s60, %s63
      %p72 = scmp.eq.s32.totalorder %s15, 7
      %p73 = por %p71, %p72
      %p74 = scmp.ne.s32.totalorder %s63, %s64
      %p75 = scmp.eq.s32.totalorder %s15, 0
      %p76 = por %p74, %p75
      %p77 = scmp.ne.s32.totalorder %s63, %s64
      %p78 = scmp.eq.s32.totalorder %s16, 7
      %p79 = por %p77, %p78
      %p81 = scmp.ne.s32.totalorder %s64, %s80
      %p82 = scmp.eq.s32.totalorder %s16, 0
      %p83 = por %p81, %p82
      %p84 = scmp.le.s32.totalorder 1, %s10
      %p85 = scmp.lt.s32.totalorder %s10, 9
      %p86 = pnand %p84, %p85
      %p87 = pneg %p86
      // Predicated region
      $region9: #{tpu_custom_call.1} parent=5 // pred_check
        _
      $region10: #{tpu_custom_call.1} parent=5 // pred_check_branch
        %89 = sbr.rel (%p86) target = $region12
      $region11: #{tpu_custom_call.1} parent=5 // pred_region
        %s90 = ssub.s32 %s10, 1
      $region12: #{tpu_custom_call.1} parent=5 // pred_fallthru
        _
      %p91 = scmp.lt.s32.totalorder %s10, 8
      // Predicated region
      $region13: #{tpu_custom_call.1} parent=5 // pred_check
        %p92 = pneg %p91
      $region14: #{tpu_custom_call.1} parent=5 // pred_check_branch
        %94 = sbr.rel (%p92) target = $region16
      $region15: #{tpu_custom_call.1} parent=5 // pred_region
        // Predicated region
        $region17: #{tpu_custom_call.1} parent=15 // pred_check
          %p95 = pneg %p44
        $region18: #{tpu_custom_call.1} parent=15 // pred_check_branch
          %97 = sbr.rel (%p95) target = $region20
        $region19: #{tpu_custom_call.1} parent=15 // pred_region
          %s98 = smul.u32 8, %s18
          %p99 = scmp.lt.s32.totalorder %s17, 1
          %s100 = scalar_select %p99, %s17, 1
          %p101 = scmp.lt.s32.totalorder %s98, 31
          %s102 = scalar_select %p101, %s98, 31
          %s103 = smul.addr %s100, 32
          %s104 = sadd.s32 %s102, %s103
          %s105 = smul.addr %s104, 8
          %s106 = scalar_lea.vmem %s0, %s105
          %s107 = smul.u32 8, %s18
        $region20: #{tpu_custom_call.1} parent=15 // pred_fallthru
          _
      $region16: #{tpu_custom_call.1} parent=5 // pred_fallthru
        _
      %p108 = scmp.le.s32.totalorder 1, %s10
      %p109 = scmp.lt.s32.totalorder %s10, 9
      %p110 = pnand %p108, %p109
      %p111 = pneg %p110
      // Predicated region
      $region21: #{tpu_custom_call.1} parent=5 // pred_check
        _
      $region22: #{tpu_custom_call.1} parent=5 // pred_check_branch
        %113 = sbr.rel (%p110) target = $region24
      $region23: #{tpu_custom_call.1} parent=5 // pred_region
        %s114 = ssub.s32 %s10, 1
        %s115 = smul.u32 8, %s20
        %p116 = scmp.lt.s32.totalorder %s19, 1
        %s117 = scalar_select %p116, %s19, 1
        %p118 = scmp.lt.s32.totalorder %s115, 31
        %s119 = scalar_select %p118, %s115, 31
        %s120 = smul.addr %s117, 32
        %s121 = sadd.s32 %s119, %s120
        %s122 = smul.addr %s121, 8
        %s123 = scalar_lea.vmem %s0, %s122
        %p124 = pneg %p50
        %p125 = pneg %p47
        %p126 = pneg %p76
        %p127 = pneg %p73
        %s128 = sand.u32 %s63, 1
        %s129 = scalar_lea.sflag [#allocation3], %s128
        %s130 = sand.u32 %s63, 1
        %s131 = scalar_lea.vmem [#allocation2], %s130
        %s132 = smul.u32 8, %s20
        %p133 = scmp.lt.s32.totalorder %s19, 1
        %s134 = scalar_select %p133, %s19, 1
        %p135 = scmp.lt.s32.totalorder %s132, 31
        %s136 = scalar_select %p135, %s132, 31
        %s137 = smul.addr %s134, 32
        %s138 = sadd.s32 %s136, %s137
        %s139 = smul.addr %s138, 8
        %s140 = scalar_lea.vmem %s0, %s139
        %s141 = smul.u32 8, %s20
        %p142 = scmp.eq.s32.totalorder %s20, 0
        // Predicated region
        $region25: #{tpu_custom_call.1} parent=23 // pred_check
          %p143 = pneg %p142
        $region26: #{tpu_custom_call.1} parent=23 // pred_check_branch
          %145 = sbr.rel (%p143) target = $region28
        $region27: #{tpu_custom_call.1} parent=23 // pred_region
          %vm146 = vcmask 253952
          %147 = vst.msk [vmem:[%s131] sm:$0x1] %vm146, 0.0
        $region28: #{tpu_custom_call.1} parent=23 // pred_fallthru
          _
        %v148 = vld [vmem:[%s140] sm:$0xff]
        %v149 = vld [vmem:[%s140 + $0x8] sm:$0xff]
        %v150 = vld [vmem:[%s140 + $0x10] sm:$0xff]
        %v151 = vld [vmem:[%s140 + $0x18] sm:$0xff]
        %v152 = vld [vmem:[%s140 + $0x20] sm:$0xff]
        %v153 = vld [vmem:[%s140 + $0x28] sm:$0xff]
        %v154 = vld [vmem:[%s140 + $0x30] sm:$0xff]
        %v155 = vld [vmem:[%s140 + $0x38] sm:$0xff]
        %v156 = vld [vmem:[%s131] sm:$0x1]
        %vm157 = vcmask 261120
        %v158 = vsel %vm157, %v148, 0.0
        %v159 = vsel %vm157, %v149, 0.0
        %v160 = vadd.f32 %v158, %v159
        %v161 = vsel %vm157, %v150, 0.0
        %v162 = vadd.f32 %v160, %v161
        %v163 = vsel %vm157, %v151, 0.0
        %v164 = vadd.f32 %v162, %v163
        %v165 = vsel %vm157, %v152, 0.0
        %v166 = vadd.f32 %v164, %v165
        %v167 = vsel %vm157, %v153, 0.0
        %v168 = vadd.f32 %v166, %v167
        %v169 = vsel %vm157, %v154, 0.0
        %v170 = vadd.f32 %v168, %v169
        %v171 = vsel %vm157, %v155, 0.0
        %v172 = vadd.f32 %v170, %v171
        %v173 = vrot.slane %v172, 4
        %v174 = vadd.f32 %v172, %v173
        %v175 = vrot.slane %v174, 2
        %v176 = vadd.f32 %v174, %v175
        %v177 = vrot.slane %v176, 1
        %v178 = vadd.f32 %v176, %v177
        %v179 = vadd.f32 %v156, %v178
        %vm180 = vcmask 253952
        %181 = vst.msk [vmem:[%s131] sm:$0x1] %vm180, %v179
        %p182 = scmp.eq.s32.totalorder %s20, 3
        // Predicated region
        $region29: #{tpu_custom_call.1} parent=23 // pred_check
          %p183 = pneg %p182
        $region30: #{tpu_custom_call.1} parent=23 // pred_check_branch
          %185 = sbr.rel (%p183) target = $region32
        $region31: #{tpu_custom_call.1} parent=23 // pred_region
          %v186 = vld [vmem:[%s131] sm:$0x1]
          %v187 = vmul.f32 %v186, 0.00390625
          %188 = vst.msk [vmem:[%s131] sm:$0x1] %vm180, %v187
        $region32: #{tpu_custom_call.1} parent=23 // pred_fallthru
          _
        %s189 = sand.u32 %s63, 1
        %s190 = scalar_lea.sflag [#allocation3], %s189
        %s191 = sand.u32 %s63, 1
        %s192 = scalar_lea.vmem [#allocation2], %s191
        // Predicated region
        $region33: #{tpu_custom_call.1} parent=23 // pred_check
          %p193 = pneg %p73
        $region34: #{tpu_custom_call.1} parent=23 // pred_check_branch
          %195 = sbr.rel (%p193) target = $region36
        $region35: #{tpu_custom_call.1} parent=23 // pred_region
          %s197 = ssub.s32 16, 16
          %198 = vsyncadd %s190, %s197
          %s199 = smul.addr %s19, 16
          %s200 = scalar_lea.hbm %s1, %s199
          %s202 = sshll.u32 %s192, 4
          %s203 = int_to_ptr.vmem [resolvable:$true] %s202
          %205 = dma.vmem_to_hbm [thread:$0]  %s203, 16, %s200, %s190
        $region36: #{tpu_custom_call.1} parent=23 // pred_fallthru
          _
      $region24: #{tpu_custom_call.1} parent=5 // pred_fallthru
        _
      %p206 = scmp.le.s32.totalorder 2, %s10
      // Predicated region
      $region37: #{tpu_custom_call.1} parent=5 // pred_check
        %p207 = pneg %p206
      $region38: #{tpu_custom_call.1} parent=5 // pred_check_branch
        %209 = sbr.rel (%p207) target = $region40
      $region39: #{tpu_custom_call.1} parent=5 // pred_region
        %s210 = ssub.s32 %s10, 2
        // Predicated region
        $region41: #{tpu_custom_call.1} parent=39 // pred_check
          %p211 = pneg %p79
        $region42: #{tpu_custom_call.1} parent=39 // pred_check_branch
          %213 = sbr.rel (%p211) target = $region44
        $region43: #{tpu_custom_call.1} parent=39 // pred_region
          %s214 = sand.u32 %s64, 1
          %s215 = scalar_lea.sflag [#allocation3], %s214
          %s216 = sand.u32 %s64, 1
          %s217 = scalar_lea.vmem [#allocation2], %s216
          %218 = dma.done %s215, 16
        $region44: #{tpu_custom_call.1} parent=39 // pred_fallthru
          _
      $region40: #{tpu_custom_call.1} parent=5 // pred_fallthru
        _
    $region6: #{tpu_custom_call.1} parent=1 // loop_footer
      %s14 = sadd.s32 1, %s10
    $region7: #{tpu_custom_call.1} parent=1 // loop_footer_branch
      %9 = sbr.rel target = $region3
    $region8: #{tpu_custom_call.1} parent=1 // loop_exit
      _
    %219 = vsyncpa [#allocation3], 1
    %s220 = scalar_lea.sflag [#allocation3], 1
    %221 = vsyncpa %s220, 1

</llo_original>
